<compile_context>
chip_gen: v7x
topology: tpu7x:2x2x1
jax: 0.10.0
libtpu: 0.0.40
codegen_flags: <defaults>
</compile_context>

<pallas_src>
import functools

import jax
import jax.numpy as jnp
from jax import lax
from jax.experimental import pallas as pl
from jax.experimental.pallas import tpu as pltpu

NUM_ACTIONS = 4
IN_DIM = 32
HID_DIM = 64
DEFAULT_TILE_B = 8192  # multiple of 128 lanes; ~3 MiB/step of VMEM in f32


def _round_up(n, m):
    return ((n + m - 1) // m) * m


def _qnet_kernel(x_ref, w1_ref, b1_ref, w2_ref, b2_ref, outT_ref, *, compute_dtype):
    # x_ref:  (TILE_B, 32)  native (batch, feature) layout
    # w1_ref: (64, 32)   b1_ref: (64, 1)
    # w2_ref: (4, 64)    b2_ref: (4, 1)
    # outT_ref: (4, TILE_B)  batch on the lane axis -> lane-dense store
    x = x_ref[...]
    w1 = w1_ref[...]
    w2 = w2_ref[...]
    if compute_dtype is not None:
        x = x.astype(compute_dtype)
        w1 = w1.astype(compute_dtype)
        w2 = w2.astype(compute_dtype)

    # fc1: contract the 32-wide feature axis of both operands -> (64, TILE_B).
    # The transpose-like reorientation rides the MXU/XLU inside VMEM.
    h = lax.dot_general(
        w1, x,
        dimension_numbers=(((1,), (1,)), ((), ())),
        preferred_element_type=jnp.float32,
    )
    # Bias + ReLU epilogue in f32 (bias broadcasts along the lane axis).
    h = jnp.maximum(h + b1_ref[...].astype(jnp.float32), 0.0)

    # fc2: (4, 64) @ (64, TILE_B) -> (4, TILE_B)
    if compute_dtype is not None:
        h = h.astype(compute_dtype)
    y = jnp.dot(w2, h, preferred_element_type=jnp.float32)
    y = y + b2_ref[...].astype(jnp.float32)
    outT_ref[...] = y.astype(outT_ref.dtype)


def qnetwork_forward(x, w1, b1, w2, b2, *, tile_b=DEFAULT_TILE_B,
                     compute_dtype=None, batch_major_out=True):
    """x: (B, 32), w1: (64, 32), b1: (64,), w2: (4, 64), b2: (4,)  (PyTorch
    (out_features, in_features) layout).  Returns (B, NUM_ACTIONS) f32, or the
    lane-dense (NUM_ACTIONS, B) slab if batch_major_out=False."""
    B = x.shape[0]
    assert x.shape[1] == IN_DIM

    # Batch tile: multiple of 128 lanes, capped at ~ceil(B/2) so the parallel
    # batch axis has >= 2 grid steps whenever the batch is large enough
    # (lets v7x shard the grid across both TensorCores).
    half = max(128, _round_up(pl.cdiv(B, 2), 128))
    tile_b_eff = max(128, min(_round_up(tile_b, 128), half))
    grid = (pl.cdiv(B, tile_b_eff),)

    b1_2d = b1.reshape(HID_DIM, 1)
    b2_2d = b2.reshape(NUM_ACTIONS, 1)

    kernel = functools.partial(_qnet_kernel, compute_dtype=compute_dtype)

    outT = pl.pallas_call(
        kernel,
        out_shape=jax.ShapeDtypeStruct((NUM_ACTIONS, B), jnp.float32),
        grid_spec=pltpu.PrefetchScalarGridSpec(
            num_scalar_prefetch=0,
            grid=grid,
            in_specs=[
                # x marches along the batch axis in its native layout; the
                # partial edge block (B % tile) is masked by Pallas.
                pl.BlockSpec((tile_b_eff, IN_DIM), lambda i: (i, 0)),
                # Weights / biases: same block every step -> VMEM-resident.
                pl.BlockSpec((HID_DIM, IN_DIM), lambda i: (0, 0)),
                pl.BlockSpec((HID_DIM, 1), lambda i: (0, 0)),
                pl.BlockSpec((NUM_ACTIONS, HID_DIM), lambda i: (0, 0)),
                pl.BlockSpec((NUM_ACTIONS, 1), lambda i: (0, 0)),
            ],
            out_specs=pl.BlockSpec((NUM_ACTIONS, tile_b_eff), lambda i: (0, i)),
        ),
        compiler_params=pltpu.CompilerParams(
            # Batch-tile axis is independent -> shard across TCs on v7x.
            dimension_semantics=("parallel",),
        ),
    )(x, w1, b1_2d, w2, b2_2d)

    if batch_major_out:
        return outT.T  # (B, NUM_ACTIONS)
    return outT        # (NUM_ACTIONS, B): skips the final transpose


def init_params(key):
    """PyTorch Linear default init (U[-1/sqrt(fan_in), +1/sqrt(fan_in)]),
    weights kept in PyTorch (out_features, in_features) layout."""
    k1, k2, k3, k4 = jax.random.split(key, 4)
    bound1 = 1.0 / jnp.sqrt(IN_DIM)
    bound2 = 1.0 / jnp.sqrt(HID_DIM)
    w1 = jax.random.uniform(k1, (HID_DIM, IN_DIM), jnp.float32, -bound1, bound1)
    b1 = jax.random.uniform(k2, (HID_DIM,), jnp.float32, -bound1, bound1)
    w2 = jax.random.uniform(k3, (NUM_ACTIONS, HID_DIM), jnp.float32, -bound2, bound2)
    b2 = jax.random.uniform(k4, (NUM_ACTIONS,), jnp.float32, -bound2, bound2)
    return w1, b1, w2, b2


def _ref_forward(x, w1, b1, w2, b2):
    return jnp.maximum(x @ w1.T + b1, 0.0) @ w2.T + b2


if __name__ == "__main__":
    key = jax.random.PRNGKey(0)
    kx1, kx2, kp = jax.random.split(key, 3)
    w1, b1, w2, b2 = init_params(kp)

    # Small batch: single (partial) tile.
    B1 = 8
    x1 = jax.random.normal(kx1, (B1, IN_DIM), jnp.float32)
    out1 = jax.block_until_ready(qnetwork_forward(x1, w1, b1, w2, b2))
    assert out1.shape == (B1, NUM_ACTIONS)
    assert jnp.allclose(out1, _ref_forward(x1, w1, b1, w2, b2), atol=1e-5, rtol=1e-5)

    # Non-divisible batch: exercises multi-step grid + masked edge block.
    B2 = 300
    x2 = jax.random.normal(kx2, (B2, IN_DIM), jnp.float32)
    out2 = jax.block_until_ready(qnetwork_forward(x2, w1, b1, w2, b2))
    assert out2.shape == (B2, NUM_ACTIONS)
    assert jnp.allclose(out2, _ref_forward(x2, w1, b1, w2, b2), atol=1e-5, rtol=1e-5)
    assert jnp.all(jnp.isfinite(out2))

    print("KERNEL_OK")
</pallas_src>

<mosaic_0001>
module attributes {stable_mosaic.version = 11 : i64} {
  func.func @_qnet_kernel(%arg0: i32, %arg1: memref<128x32xf32, #tpu.memory_space<vmem>>, %arg2: memref<64x32xf32, #tpu.memory_space<vmem>>, %arg3: memref<64x1xf32, #tpu.memory_space<vmem>>, %arg4: memref<4x64xf32, #tpu.memory_space<vmem>>, %arg5: memref<4x1xf32, #tpu.memory_space<vmem>>, %arg6: memref<4x128xf32, #tpu.memory_space<vmem>>) attributes {dimension_semantics = [#tpu.dimension_semantics<parallel>], iteration_bounds = array<i64: 1>, scalar_prefetch = 0 : i64, scratch_operands = 0 : i64, tpu.core_type = #tpu.core_type<tc>, window_params = [{transform_indices = @transform_0, window_bounds = array<i64: 128, 32>}, {pipeline_mode = #tpu.pipeline_mode<synchronous>, transform_indices = @transform_1, window_bounds = array<i64: 64, 32>}, {pipeline_mode = #tpu.pipeline_mode<synchronous>, transform_indices = @transform_2, window_bounds = array<i64: 64, 1>}, {pipeline_mode = #tpu.pipeline_mode<synchronous>, transform_indices = @transform_3, window_bounds = array<i64: 4, 64>}, {pipeline_mode = #tpu.pipeline_mode<synchronous>, transform_indices = @transform_4, window_bounds = array<i64: 4, 1>}, {transform_indices = @transform_5, window_bounds = array<i64: 4, 128>}]} {
    %c0 = arith.constant 0 : index
    %c0_0 = arith.constant 0 : index
    %0 = vector.load %arg1[%c0, %c0_0] : memref<128x32xf32, #tpu.memory_space<vmem>>, vector<128x32xf32>
    %c0_1 = arith.constant 0 : index
    %c0_2 = arith.constant 0 : index
    %1 = vector.load %arg2[%c0_1, %c0_2] : memref<64x32xf32, #tpu.memory_space<vmem>>, vector<64x32xf32>
    %c0_3 = arith.constant 0 : index
    %c0_4 = arith.constant 0 : index
    %2 = vector.load %arg4[%c0_3, %c0_4] : memref<4x64xf32, #tpu.memory_space<vmem>>, vector<4x64xf32>
    %cst = arith.constant dense<0.000000e+00> : vector<64x128xf32>
    %3 = tpu.matmul %1, %0, %cst {dimension_numbers = #tpu.dot_dimension_numbers<[1], [1], [0], [0], [0, 0, 1, 0], [], []>} : vector<64x32xf32>, vector<128x32xf32>, vector<64x128xf32> -> vector<64x128xf32>
    %c0_5 = arith.constant 0 : index
    %c0_6 = arith.constant 0 : index
    %4 = vector.load %arg3[%c0_5, %c0_6] : memref<64x1xf32, #tpu.memory_space<vmem>>, vector<64x1xf32>
    %5 = vector.broadcast %4 : vector<64x1xf32> to vector<64x128xf32>
    %6 = arith.addf %3, %5 : vector<64x128xf32>
    %cst_7 = arith.constant 0.000000e+00 : f32
    %7 = vector.broadcast %cst_7 : f32 to vector<64x128xf32>
    %8 = arith.maximumf %6, %7 : vector<64x128xf32>
    %cst_8 = arith.constant dense<0.000000e+00> : vector<4x128xf32>
    %9 = tpu.matmul %2, %8, %cst_8 {dimension_numbers = #tpu.dot_dimension_numbers<[1], [0], [0], [1], [0, 0, 1, 1], [], []>} : vector<4x64xf32>, vector<64x128xf32>, vector<4x128xf32> -> vector<4x128xf32>
    %c0_9 = arith.constant 0 : index
    %c0_10 = arith.constant 0 : index
    %10 = vector.load %arg5[%c0_9, %c0_10] : memref<4x1xf32, #tpu.memory_space<vmem>>, vector<4x1xf32>
    %11 = vector.broadcast %10 : vector<4x1xf32> to vector<4x128xf32>
    %12 = arith.addf %9, %11 : vector<4x128xf32>
    %c0_11 = arith.constant 0 : index
    %c0_12 = arith.constant 0 : index
    %13 = vector.load %arg6[%c0_11, %c0_12] : memref<4x128xf32, #tpu.memory_space<vmem>>, vector<4x128xf32>
    tpu.vector_store %arg6[%c0_11, %c0_12], %12 {strides = array<i32>} : memref<4x128xf32, #tpu.memory_space<vmem>>, vector<4x128xf32>,
    return
  }
  func.func @transform_0(%arg0: i32) -> (i32, i32) {
    %c0_i32 = arith.constant 0 : i32
    %c0_i32_0 = arith.constant 0 : i32
    return %arg0, %c0_i32 : i32, i32
  }
  func.func @transform_1(%arg0: i32) -> (i32, i32) {
    %c0_i32 = arith.constant 0 : i32
    %c0_i32_0 = arith.constant 0 : i32
    %c0_i32_1 = arith.constant 0 : i32
    return %c0_i32, %c0_i32_0 : i32, i32
  }
  func.func @transform_2(%arg0: i32) -> (i32, i32) {
    %c0_i32 = arith.constant 0 : i32
    %c0_i32_0 = arith.constant 0 : i32
    %c0_i32_1 = arith.constant 0 : i32
    return %c0_i32, %c0_i32_0 : i32, i32
  }
  func.func @transform_3(%arg0: i32) -> (i32, i32) {
    %c0_i32 = arith.constant 0 : i32
    %c0_i32_0 = arith.constant 0 : i32
    %c0_i32_1 = arith.constant 0 : i32
    return %c0_i32, %c0_i32_0 : i32, i32
  }
  func.func @transform_4(%arg0: i32) -> (i32, i32) {
    %c0_i32 = arith.constant 0 : i32
    %c0_i32_0 = arith.constant 0 : i32
    %c0_i32_1 = arith.constant 0 : i32
    return %c0_i32, %c0_i32_0 : i32, i32
  }
  func.func @transform_5(%arg0: i32) -> (i32, i32) {
    %c0_i32 = arith.constant 0 : i32
    %c0_i32_0 = arith.constant 0 : i32
    return %c0_i32, %arg0 : i32, i32
  }
}

</mosaic_0001>

<llo_original>
// kernel: tpu_custom_call.1
$region0: #{tpu_custom_call.1}
  #allocation0 [shape = 'u32[]', space=smem, size = 0x4, offset = 0x4, fixed_abs, tag = 'smem constant byte address 0x4 - core index']
  #allocation1 [shape = 'u32[144,128]{1,0:T(1,128)}', space=vmem, size = 0x12000, scoped, tag = 'internal scratch']
  %s0 = inlined_call_operand.vmem [shape: f32[8,32], index: 0, kind: input, shape index: {}]
  %s1 = inlined_call_operand.vmem [shape: f32[64,32], index: 1, kind: input, shape index: {}]
  %s2 = inlined_call_operand.vmem [shape: f32[64,1], index: 2, kind: input, shape index: {}]
  %s3 = inlined_call_operand.vmem [shape: f32[4,64], index: 3, kind: input, shape index: {}]
  %s4 = inlined_call_operand.vmem [shape: f32[4,1], index: 4, kind: input, shape index: {}]
  %s5 = inlined_call_operand.hbm [shape: f32[4,8], index: 5, kind: output, shape index: {}]
  %s6 = sld [smem:[#allocation0]]
  $region30: #{tpu_custom_call.1} parent=0
    _
  %s8 = ssub.s32 1, %s6
  %s9 = scalar_select 0, %s8, %s6
  $region1: #{tpu_custom_call.1} parent=0
    #allocation2 [shape = 'u8[2048]{0}', space=vmem, size = 0x800, scoped, tag = 'output window, operand 0, single buffered']
    #allocation3 [shape = 's32[1]{0}', space=sflag, size = 0x4, scoped, tag = 'scoped memory for tpu_custom_call.1']
    %10 = vsyncpa [#allocation3], 0
    // Predicated region
    $region2: #{tpu_custom_call.1} parent=1 // pred_check
      _
    $region3: #{tpu_custom_call.1} parent=1 // pred_check_branch
      %12 = sbr.rel (0) target = $region5
    $region4: #{tpu_custom_call.1} parent=1 // pred_region
      _
    $region5: #{tpu_custom_call.1} parent=1 // pred_fallthru
      _
    // Predicated region
    $region6: #{tpu_custom_call.1} parent=1 // pred_check
      _
    $region7: #{tpu_custom_call.1} parent=1 // pred_check_branch
      %14 = sbr.rel (0) target = $region9
    $region8: #{tpu_custom_call.1} parent=1 // pred_region
      _
    $region9: #{tpu_custom_call.1} parent=1 // pred_fallthru
      _
    // Predicated region
    $region10: #{tpu_custom_call.1} parent=1 // pred_check
      _
    $region11: #{tpu_custom_call.1} parent=1 // pred_check_branch
      %16 = sbr.rel (0) target = $region13
    $region12: #{tpu_custom_call.1} parent=1 // pred_region
      _
    $region13: #{tpu_custom_call.1} parent=1 // pred_fallthru
      _
    // Predicated region
    $region14: #{tpu_custom_call.1} parent=1 // pred_check
      _
    $region15: #{tpu_custom_call.1} parent=1 // pred_check_branch
      %18 = sbr.rel (0) target = $region17
    $region16: #{tpu_custom_call.1} parent=1 // pred_region
      _
    $region17: #{tpu_custom_call.1} parent=1 // pred_fallthru
      _
    // Predicated region
    $region18: #{tpu_custom_call.1} parent=1 // pred_check
      _
    $region19: #{tpu_custom_call.1} parent=1 // pred_check_branch
      %20 = sbr.rel (0) target = $region21
    $region20: #{tpu_custom_call.1} parent=1 // pred_region
      _
    $region21: #{tpu_custom_call.1} parent=1 // pred_fallthru
      _
    %v21 = vld [vmem:[%s0] sm:$0xff]
    %v22 = vld [vmem:[%s0 + $0x8] sm:$0xff]
    %v23 = vld [vmem:[%s0 + $0x10] sm:$0xff]
    %v24 = vld [vmem:[%s0 + $0x18] sm:$0xff]
    %v25 = vld [vmem:[%s0 + $0x20] sm:$0xff]
    %v26 = vld [vmem:[%s0 + $0x28] sm:$0xff]
    %v27 = vld [vmem:[%s0 + $0x30] sm:$0xff]
    %v28 = vld [vmem:[%s0 + $0x38] sm:$0xff]
    %v29 = vld [vmem:[%s0 + $0x40] sm:$0xff]
    %v30 = vld [vmem:[%s0 + $0x48] sm:$0xff]
    %v31 = vld [vmem:[%s0 + $0x50] sm:$0xff]
    %v32 = vld [vmem:[%s0 + $0x58] sm:$0xff]
    %v33 = vld [vmem:[%s0 + $0x60] sm:$0xff]
    %v34 = vld [vmem:[%s0 + $0x68] sm:$0xff]
    %v35 = vld [vmem:[%s0 + $0x70] sm:$0xff]
    %v36 = vld [vmem:[%s0 + $0x78] sm:$0xff]
    %v37 = vld [vmem:[%s1] sm:$0xff]
    %v38 = vld [vmem:[%s1 + $0x8] sm:$0xff]
    %v39 = vld [vmem:[%s1 + $0x10] sm:$0xff]
    %v40 = vld [vmem:[%s1 + $0x18] sm:$0xff]
    %v41 = vld [vmem:[%s1 + $0x20] sm:$0xff]
    %v42 = vld [vmem:[%s1 + $0x28] sm:$0xff]
    %v43 = vld [vmem:[%s1 + $0x30] sm:$0xff]
    %v44 = vld [vmem:[%s1 + $0x38] sm:$0xff]
    %v45 = vld [vmem:[%s3] sm:$0xf]
    %v46 = vld [vmem:[%s2] sm:$0xff]
    %v47 = vld [vmem:[%s2 + $0x8] sm:$0xff]
    %v48 = vld [vmem:[%s2 + $0x10] sm:$0xff]
    %v49 = vld [vmem:[%s2 + $0x18] sm:$0xff]
    %v50 = vld [vmem:[%s2 + $0x20] sm:$0xff]
    %v51 = vld [vmem:[%s2 + $0x28] sm:$0xff]
    %v52 = vld [vmem:[%s2 + $0x30] sm:$0xff]
    %v53 = vld [vmem:[%s2 + $0x38] sm:$0xff]
    %55 = vset.pattern.permute.xlu0 0
    %56 = vperm.xlu0 %55, %v46
    %v57 = vpop.permute.xlu0 %56
    %60 = vset.pattern.permute.xlu0 0
    %61 = vperm.xlu0 %60, %v47
    %v62 = vpop.permute.xlu0 %61
    %65 = vset.pattern.permute.xlu0 0
    %66 = vperm.xlu0 %65, %v48
    %v67 = vpop.permute.xlu0 %66
    %70 = vset.pattern.permute.xlu0 0
    %71 = vperm.xlu0 %70, %v49
    %v72 = vpop.permute.xlu0 %71
    %75 = vset.pattern.permute.xlu0 0
    %76 = vperm.xlu0 %75, %v50
    %v77 = vpop.permute.xlu0 %76
    %80 = vset.pattern.permute.xlu0 0
    %81 = vperm.xlu0 %80, %v51
    %v82 = vpop.permute.xlu0 %81
    %85 = vset.pattern.permute.xlu0 0
    %86 = vperm.xlu0 %85, %v52
    %v87 = vpop.permute.xlu0 %86
    %90 = vset.pattern.permute.xlu0 0
    %91 = vperm.xlu0 %90, %v53
    %v92 = vpop.permute.xlu0 %91
    %vm94 = vcmask 261120
    %v96 = vsel %vm94, %v37, 0
    %v99 = vsel %vm94, %v38, 0
    %v102 = vsel %vm94, %v39, 0
    %v105 = vsel %vm94, %v40, 0
    %v108 = vsel %vm94, %v41, 0
    %v111 = vsel %vm94, %v42, 0
    %v114 = vsel %vm94, %v43, 0
    %v117 = vsel %vm94, %v44, 0
    %v120 = vsel %vm94, %v21, 0
    %v123 = vsel %vm94, %v22, 0
    %v126 = vsel %vm94, %v23, 0
    %v129 = vsel %vm94, %v24, 0
    %v132 = vsel %vm94, %v25, 0
    %v135 = vsel %vm94, %v26, 0
    %v138 = vsel %vm94, %v27, 0
    %v141 = vsel %vm94, %v28, 0
    %v144 = vsel %vm94, %v29, 0
    %v147 = vsel %vm94, %v30, 0
    %v150 = vsel %vm94, %v31, 0
    %v153 = vsel %vm94, %v32, 0
    %v156 = vsel %vm94, %v33, 0
    %v159 = vsel %vm94, %v34, 0
    %v162 = vsel %vm94, %v35, 0
    %v165 = vsel %vm94, %v36, 0
    %167 = vmatprep.subr.mxu0 0.0
    %168 = vmatpush1.xpose.msra.mxu0 %v120
    %169 = vmatprep.subr.mxu0 0.0
    %170 = vmatpush1.xpose.msra.mxu0 %v123
    %171 = vmatprep.subr.mxu0 0.0
    %172 = vmatpush1.xpose.msra.mxu0 %v126
    %173 = vmatprep.subr.mxu0 0.0
    %174 = vmatpush1.xpose.msra.mxu0 %v129
    %175 = vmatprep.subr.mxu0 0.0
    %176 = vmatpush1.xpose.msra.mxu0 %v132
    %177 = vmatprep.subr.mxu0 0.0
    %178 = vmatpush1.xpose.msra.mxu0 %v135
    %179 = vmatprep.subr.mxu0 0.0
    %180 = vmatpush1.xpose.msra.mxu0 %v138
    %181 = vmatprep.subr.mxu0 0.0
    %182 = vmatpush1.xpose.msra.mxu0 %v141
    %183 = vmatprep.subr.mxu0 0.0
    %184 = vmatpush1.xpose.msra.mxu0 %v144
    %185 = vmatprep.subr.mxu0 0.0
    %186 = vmatpush1.xpose.msra.mxu0 %v147
    %187 = vmatprep.subr.mxu0 0.0
    %188 = vmatpush1.xpose.msra.mxu0 %v150
    %189 = vmatprep.subr.mxu0 0.0
    %190 = vmatpush1.xpose.msra.mxu0 %v153
    %191 = vmatprep.subr.mxu0 0.0
    %192 = vmatpush1.xpose.msra.mxu0 %v156
    %193 = vmatprep.subr.mxu0 0.0
    %194 = vmatpush1.xpose.msra.mxu0 %v159
    %195 = vmatprep.subr.mxu0 0.0
    %196 = vmatpush1.xpose.msra.mxu0 %v162
    %197 = vmatprep.subr.mxu0 0.0
    %198 = vmatpush1.xpose.msra.mxu0 %v165
    %199 = vmatprep.subr.mxu0 0.0
    %200 = vmatpush1.xpose.msra.mxu0 0.0
    %201 = vmatprep.subr.mxu0 0.0
    %202 = vmatpush1.xpose.msra.mxu0 0.0
    %203 = vmatprep.subr.mxu0 0.0
    %204 = vmatpush1.xpose.msra.mxu0 0.0
    %205 = vmatprep.subr.mxu0 0.0
    %206 = vmatpush1.xpose.msra.mxu0 0.0
    %207 = vmatprep.subr.mxu0 0.0
    %208 = vmatpush1.xpose.msra.mxu0 0.0
    %209 = vmatprep.subr.mxu0 0.0
    %210 = vmatpush1.xpose.msra.mxu0 0.0
    %211 = vmatprep.subr.mxu0 0.0
    %212 = vmatpush1.xpose.msra.mxu0 0.0
    %213 = vmatprep.subr.mxu0 0.0
    %214 = vmatpush1.xpose.msra.mxu0 0.0
    %215 = vmatprep.subr.mxu0 0.0
    %216 = vmatpush1.xpose.msra.mxu0 0.0
    %217 = vmatprep.subr.mxu0 0.0
    %218 = vmatpush1.xpose.msra.mxu0 0.0
    %219 = vmatprep.subr.mxu0 0.0
    %220 = vmatpush1.xpose.msra.mxu0 0.0
    %221 = vmatprep.subr.mxu0 0.0
    %222 = vmatpush1.xpose.msra.mxu0 0.0
    %223 = vmatprep.subr.mxu0 0.0
    %224 = vmatpush1.xpose.msra.mxu0 0.0
    %225 = vmatprep.subr.mxu0 0.0
    %226 = vmatpush1.xpose.msra.mxu0 0.0
    %227 = vmatprep.subr.mxu0 0.0
    %228 = vmatpush1.xpose.msra.mxu0 0.0
    %229 = vmatprep.subr.mxu0 0.0
    %230 = vmatpush1.xpose.msra.mxu0 0.0
    %231 = vmatprep.mubr.f32.mxu0 0.0
    %232 = vmatmul.mubr.f32.gmra.mrb[0].mxu0 %v96
    %v233 = vpop.f32.mrb[0].mxu0
    %v234 = vadd.f32 %v57, %v233
    %v235 = vpop.f32.mrb[0].mxu0
    %236 = vmatprep.mubr.f32.mxu0 0.0
    %237 = vmatmul.mubr.f32.gmra.mrb[0].mxu0 %v99
    %v238 = vpop.f32.mrb[0].mxu0
    %v239 = vadd.f32 %v62, %v238
    %v240 = vpop.f32.mrb[0].mxu0
    %241 = vmatprep.mubr.f32.mxu0 0.0
    %242 = vmatmul.mubr.f32.gmra.mrb[0].mxu0 %v102
    %v243 = vpop.f32.mrb[0].mxu0
    %v244 = vadd.f32 %v67, %v243
    %v245 = vpop.f32.mrb[0].mxu0
    %246 = vmatprep.mubr.f32.mxu0 0.0
    %247 = vmatmul.mubr.f32.gmra.mrb[0].mxu0 %v105
    %v248 = vpop.f32.mrb[0].mxu0
    %v249 = vadd.f32 %v72, %v248
    %v250 = vpop.f32.mrb[0].mxu0
    %251 = vmatprep.mubr.f32.mxu0 0.0
    %252 = vmatmul.mubr.f32.gmra.mrb[0].mxu0 %v108
    %v253 = vpop.f32.mrb[0].mxu0
    %v254 = vadd.f32 %v77, %v253
    %v255 = vpop.f32.mrb[0].mxu0
    %256 = vmatprep.mubr.f32.mxu0 0.0
    %257 = vmatmul.mubr.f32.gmra.mrb[0].mxu0 %v111
    %v258 = vpop.f32.mrb[0].mxu0
    %v259 = vadd.f32 %v82, %v258
    %v260 = vpop.f32.mrb[0].mxu0
    %261 = vmatprep.mubr.f32.mxu0 0.0
    %262 = vmatmul.mubr.f32.gmra.mrb[0].mxu0 %v114
    %v263 = vpop.f32.mrb[0].mxu0
    %v264 = vadd.f32 %v87, %v263
    %v265 = vpop.f32.mrb[0].mxu0
    %266 = vmatprep.mubr.f32.mxu0 0.0
    %267 = vmatmul.mubr.f32.gmra.mrb[0].mxu0 %v117
    %v268 = vpop.f32.mrb[0].mxu0
    %v269 = vadd.f32 %v92, %v268
    %v270 = vpop.f32.mrb[0].mxu0
    %271 = vdwg.mxu0
    %v272 = vmax.f32 %v234, 0.0
    %v273 = vmax.f32 %v239, 0.0
    %v274 = vmax.f32 %v244, 0.0
    %v275 = vmax.f32 %v249, 0.0
    %v276 = vmax.f32 %v254, 0.0
    %v277 = vmax.f32 %v259, 0.0
    %v278 = vmax.f32 %v264, 0.0
    %v279 = vmax.f32 %v269, 0.0
    %v280 = vld [vmem:[%s4] sm:$0xf]
    %282 = vset.pattern.permute.xlu0 0
    %283 = vperm.xlu0 %282, %v280
    %v284 = vpop.permute.xlu0 %283
    %vm286 = vcmask 523264
    %v288 = vsel %vm286, %v45, 0
    %290 = vmatprep.subr.mxu0 0.0
    %291 = vmatpush1.msra.mxu0 %v272
    %292 = vmatprep.subr.mxu0 0.0
    %293 = vmatpush1.msra.mxu0 %v273
    %294 = vmatprep.subr.mxu0 0.0
    %295 = vmatpush1.msra.mxu0 %v274
    %296 = vmatprep.subr.mxu0 0.0
    %297 = vmatpush1.msra.mxu0 %v275
    %298 = vmatprep.subr.mxu0 0.0
    %299 = vmatpush1.msra.mxu0 %v276
    %300 = vmatprep.subr.mxu0 0.0
    %301 = vmatpush1.msra.mxu0 %v277
    %302 = vmatprep.subr.mxu0 0.0
    %303 = vmatpush1.msra.mxu0 %v278
    %304 = vmatprep.subr.mxu0 0.0
    %305 = vmatpush1.msra.mxu0 %v279
    %306 = vmatprep.subr.mxu0 0.0
    %307 = vmatpush1.msra.mxu0 0.0
    %308 = vmatprep.subr.mxu0 0.0
    %309 = vmatpush1.msra.mxu0 0.0
    %310 = vmatprep.subr.mxu0 0.0
    %311 = vmatpush1.msra.mxu0 0.0
    %312 = vmatprep.subr.mxu0 0.0
    %313 = vmatpush1.msra.mxu0 0.0
    %314 = vmatprep.subr.mxu0 0.0
    %315 = vmatpush1.msra.mxu0 0.0
    %316 = vmatprep.subr.mxu0 0.0
    %317 = vmatpush1.msra.mxu0 0.0
    %318 = vmatprep.subr.mxu0 0.0
    %319 = vmatpush1.msra.mxu0 0.0
    %320 = vmatprep.subr.mxu0 0.0
    %321 = vmatpush1.msra.mxu0 0.0
    %322 = vmatprep.subr.mxu0 0.0
    %323 = vmatpush1.msra.mxu0 0.0
    %324 = vmatprep.subr.mxu0 0.0
    %325 = vmatpush1.msra.mxu0 0.0
    %326 = vmatprep.subr.mxu0 0.0
    %327 = vmatpush1.msra.mxu0 0.0
    %328 = vmatprep.subr.mxu0 0.0
    %329 = vmatpush1.msra.mxu0 0.0
    %330 = vmatprep.subr.mxu0 0.0
    %331 = vmatpush1.msra.mxu0 0.0
    %332 = vmatprep.subr.mxu0 0.0
    %333 = vmatpush1.msra.mxu0 0.0
    %334 = vmatprep.subr.mxu0 0.0
    %335 = vmatpush1.msra.mxu0 0.0
    %336 = vmatprep.subr.mxu0 0.0
    %337 = vmatpush1.msra.mxu0 0.0
    %338 = vmatprep.subr.mxu0 0.0
    %339 = vmatpush1.msra.mxu0 0.0
    %340 = vmatprep.subr.mxu0 0.0
    %341 = vmatpush1.msra.mxu0 0.0
    %342 = vmatprep.subr.mxu0 0.0
    %343 = vmatpush1.msra.mxu0 0.0
    %344 = vmatprep.subr.mxu0 0.0
    %345 = vmatpush1.msra.mxu0 0.0
    %346 = vmatprep.subr.mxu0 0.0
    %347 = vmatpush1.msra.mxu0 0.0
    %348 = vmatprep.subr.mxu0 0.0
    %349 = vmatpush1.msra.mxu0 0.0
    %350 = vmatprep.subr.mxu0 0.0
    %351 = vmatpush1.msra.mxu0 0.0
    %352 = vmatprep.subr.mxu0 0.0
    %353 = vmatpush1.msra.mxu0 0.0
    %354 = vmatprep.mubr.f32.mxu0 0.0
    %355 = vmatmul.mubr.f32.gmra.mrb[0].mxu0 %v288
    %v356 = vpop.f32.mrb[0].mxu0
    %v357 = vadd.f32 %v284, %v356
    %v358 = vpop.f32.mrb[0].mxu0
    %359 = vdwg.mxu0
    %360 = vst [vmem:[#allocation2] sm:$0xf] %v357
    // Predicated region
    $region22: #{tpu_custom_call.1} parent=1 // pred_check
      _
    $region23: #{tpu_custom_call.1} parent=1 // pred_check_branch
      %362 = sbr.rel (0) target = $region25
    $region24: #{tpu_custom_call.1} parent=1 // pred_region
      %s364 = ssub.s32 64, 64
      %365 = vsyncadd [#allocation3], %s364
      %s367 = sshll.u32 [#allocation2], 4
      %s368 = int_to_ptr.vmem [resolvable:$true] %s367
      %370 = dma.vmem_to_hbm [thread:$0]  %s368, 64, %s5, [#allocation3]
    $region25: #{tpu_custom_call.1} parent=1 // pred_fallthru
      _
    // Predicated region
    $region26: #{tpu_custom_call.1} parent=1 // pred_check
      _
    $region27: #{tpu_custom_call.1} parent=1 // pred_check_branch
      %372 = sbr.rel (0) target = $region29
    $region28: #{tpu_custom_call.1} parent=1 // pred_region
      %373 = dma.done [#allocation3], 64
    $region29: #{tpu_custom_call.1} parent=1 // pred_fallthru
      _
    %374 = vsyncpa [#allocation3], 1

</llo_original>
